<compile_context>
chip_gen: v7x
topology: tpu7x:2x2x1
jax: 0.10.0
libtpu: 0.0.40
codegen_flags: <defaults>
</compile_context>

<pallas_src>
from functools import partial

import numpy as np

import jax
import jax.numpy as jnp
from jax.experimental import pallas as pl
from jax.experimental.pallas import tpu as pltpu


_EPSILON = 1.0      # forward(): parameters = softplus(logits) + 1
_POLICY_OUT = 2     # Beta(alpha, beta)
_VALUE_OUT = 1


def _round_up(x, m):
    return (x + m - 1) // m * m


# -----------------------------------------------------------------------------
# Fused kernel: padded [tm, D] activations, L fused [D, D] layers.
# ReLU after every layer except the last; stable softplus + eps applied only to
# the policy lanes of the final pre-activation, value lane passes through.
# -----------------------------------------------------------------------------
def make_agent_kernel(n_layers, policy_out, compute_dtype):
    def kernel(x_ref, w_ref, b_ref, out_ref):
        h = x_ref[...]                                        # [tm, D]
        for l in range(n_layers):                             # static unroll (L small)
            w = w_ref[l]                                      # [D, D]
            b = b_ref[l]                                      # [1, D] (f32)
            h = jnp.dot(h.astype(compute_dtype), w,
                        preferred_element_type=jnp.float32) + b
            if l < n_layers - 1:
                h = jnp.maximum(h, 0.0)
        # Numerically stable softplus (no exp overflow for large h).
        softplus = jnp.maximum(h, 0.0) + jnp.log1p(jnp.exp(-jnp.abs(h)))
        lane = jax.lax.broadcasted_iota(jnp.int32, h.shape, 1)
        out_ref[...] = jnp.where(lane < policy_out, softplus + _EPSILON, h)
    return kernel


# -----------------------------------------------------------------------------
# Host-side packing: pad every layer to [D, D] (D = lane_align-multiple) and
# fuse the policy/value heads level-by-level (value block offset by the policy
# width).  Weights may be cast to bf16 (v6e/v7x MXU-native); biases stay f32.
# -----------------------------------------------------------------------------
def pack_agent_params(common_params, policy_params, value_params,
                      *, weight_dtype=jnp.float32, lane_align=128):
    # NOTE: if hidden widths ever exceed 128, use lane_align=256 on v6e/v7x
    # (256x256 MXU); 128 is right for v5e and for this tiny config.
    if len(policy_params) != len(value_params):
        # TODO(synk): unequal policy/value head depths would need per-level
        # masking; not required for this module's standard configs.
        raise NotImplementedError("policy/value heads must have equal depth")

    all_params = common_params + policy_params + value_params
    dims = [w.shape[0] for w, _ in all_params] + [w.shape[1] for w, _ in all_params]
    D = _round_up(max(dims), lane_align)

    w_slabs, b_slabs = [], []

    def add_layer(blocks, biases):
        W = np.zeros((D, D), np.float32)
        B = np.zeros((1, D), np.float32)
        for (w, r0, c0) in blocks:
            w = np.asarray(w, np.float32)
            assert r0 + w.shape[0] <= D and c0 + w.shape[1] <= D, \
                "fused block overflows the padded [D, D] layer"
            W[r0:r0 + w.shape[0], c0:c0 + w.shape[1]] = w
        for (b, c0) in biases:
            b = np.asarray(b, np.float32).reshape(-1)
            B[0, c0:c0 + b.shape[0]] = b
        w_slabs.append(W)
        b_slabs.append(B)

    # Common trunk: Linear + ReLU each.
    for w, b in common_params:
        add_layer([(w, 0, 0)], [(b, 0)])

    # Fused heads: at each level, policy occupies columns [0, P_t),
    # value occupies columns [P_t, P_t + V_t).
    prev_v_off = 0   # level 0: both heads read the trunk output at cols [0, K)
    for (wp, bp), (wv, bv) in zip(policy_params, value_params):
        p_out, v_out = wp.shape[1], wv.shape[1]
        assert p_out + v_out <= D, "policy+value outputs overflow lane width D"
        assert prev_v_off + wv.shape[0] <= D, "value input rows overflow D"
        add_layer([(wp, 0, 0), (wv, prev_v_off, p_out)],
                  [(bp, 0), (bv, p_out)])
        prev_v_off = p_out

    w_slab = jnp.asarray(np.stack(w_slabs, axis=0)).astype(weight_dtype)  # [L, D, D]
    b_slab = jnp.asarray(np.stack(b_slabs, axis=0))                       # [L, 1, D] f32
    value_col = policy_params[-1][0].shape[1]                             # == 2
    return w_slab, b_slab, D, value_col


# -----------------------------------------------------------------------------
# Tiling choice:
#  * tiny batch  -> one sublane-aligned block (launch-bound anyway).
#  * otherwise   -> an EVEN number of tiles >= 2 (both v7x TCs busy), tiles as
#    large as batch_tile so the serial grid loop on v5e/v6e pays few per-step
#    overheads; tm derived from B so batch padding stays at a few rows.
# -----------------------------------------------------------------------------
def _choose_tiling(B, batch_tile, sublane, min_split=16):
    if B < min_split:
        return _round_up(B, sublane), 1
    n_tiles = max(2, 2 * pl.cdiv(B, 2 * batch_tile))        # even, >= 2
    tm = _round_up(pl.cdiv(B, n_tiles), sublane)
    return tm, n_tiles


# -----------------------------------------------------------------------------
# Wrapper: single jitted function -> pad + pallas_call + slices fuse into one
# dispatch.  Optional bf16 compute path for the bf16-native MXUs.
# -----------------------------------------------------------------------------
@partial(jax.jit, static_argnames=("value_col", "batch_tile", "compute_dtype"))
def agent_forward(x, w_slab, b_slab, *, value_col, batch_tile=1024,
                  compute_dtype=jnp.float32):
    B, obs = x.shape
    L, D, _ = w_slab.shape

    itemsize = jnp.dtype(compute_dtype).itemsize
    sublane = 8 * (4 // itemsize)                 # 8 for f32, 16 for bf16
    tm, n_tiles = _choose_tiling(B, batch_tile, sublane)
    Bp = tm * n_tiles

    # Pad feature dim to D and batch dim to Bp (fuses under jit; no HBM slab
    # written+reread like the old zeros+.at[].set pattern).
    x_pad = jnp.pad(x.astype(compute_dtype), ((0, Bp - B), (0, D - obs)))

    kernel = make_agent_kernel(L, _POLICY_OUT, compute_dtype)

    slab_bytes = (w_slab.size * w_slab.dtype.itemsize
                  + b_slab.size * b_slab.dtype.itemsize)
    io_bytes = (x_pad.size * x_pad.dtype.itemsize + Bp * D * 4)
    cost = pl.CostEstimate(flops=2 * Bp * L * D * D,
                           transcendentals=2 * Bp * D,
                           bytes_accessed=slab_bytes + io_bytes)

    # Explicit VMEM budget: double-buffered slabs + double-buffered in/out
    # tiles, with headroom (v5e default scoped limit is only 16 MiB).
    act_bytes = 2 * tm * D * (itemsize + 4)
    vmem_limit = int(min(48 * 2**20, max(8 * 2**20, 3 * (2 * slab_bytes + act_bytes))))

    out = pl.pallas_call(
        kernel,
        out_shape=jax.ShapeDtypeStruct((Bp, D), jnp.float32),
        grid=(n_tiles,),
        in_specs=[
            pl.BlockSpec((tm, D), lambda i: (i, 0)),        # activations
            pl.BlockSpec((L, D, D), lambda i: (0, 0, 0)),   # fused weight slab
            pl.BlockSpec((L, 1, D), lambda i: (0, 0, 0)),   # fused bias slab
        ],
        out_specs=pl.BlockSpec((tm, D), lambda i: (i, 0)),  # lane-dense output slab
        compiler_params=pltpu.CompilerParams(
            dimension_semantics=("parallel",),
            vmem_limit_bytes=vmem_limit),
        cost_estimate=cost,
    )(x_pad, w_slab, b_slab)

    parameters = out[:B, :value_col]                     # [B, 2]  (alpha, beta)
    state_value = out[:B, value_col:value_col + 1]       # [B, 1]
    return parameters, state_value


# -----------------------------------------------------------------------------
# Deterministic parameter construction (mimics nn.Linear default init shapes;
# weights stored [in, out], biases [1, out]).
# -----------------------------------------------------------------------------
def make_linear_params(key, in_features, out_features):
    kw, kb = jax.random.split(key)
    bound = 1.0 / jnp.sqrt(jnp.float32(in_features))
    w = jax.random.uniform(kw, (in_features, out_features), jnp.float32,
                           -bound, bound)
    b = jax.random.uniform(kb, (1, out_features), jnp.float32, -bound, bound)
    return w, b


def make_mlp_params(key, layer_sizes):
    params = []
    keys = jax.random.split(key, len(layer_sizes) - 1)
    for i in range(1, len(layer_sizes)):
        params.append(make_linear_params(keys[i - 1],
                                         layer_sizes[i - 1], layer_sizes[i]))
    return params


# Pure-JAX reference of ContiniousAgent.forward for verification.
def reference_forward(x, common_params, policy_params, value_params):
    hp = jax.lax.Precision.HIGHEST

    def run(h, params, last_linear):
        n = len(params)
        for i, (w, b) in enumerate(params):
            h = jnp.dot(h, w, precision=hp) + b
            if not (last_linear and i == n - 1):
                h = jnp.maximum(h, 0.0)
        return h

    h = run(x, common_params, last_linear=False)
    logits = run(h, policy_params, last_linear=True)
    value = run(h, value_params, last_linear=True)
    parameters = jnp.log1p(jnp.exp(logits)) + _EPSILON
    return parameters, value


if __name__ == "__main__":
    # Module config (small, consistent with ContiniousAgent.__init__).
    observation_space_size = 32
    min_price, max_price = 1.0, 10.0
    common_hidden_layers = [64, 32]
    policy_hidden_layers = [32]
    value_hidden_layers = [32]

    key = jax.random.PRNGKey(0)
    k_x, k_x2, k_c, k_p, k_v = jax.random.split(key, 5)

    common_params = make_mlp_params(
        k_c, [observation_space_size] + common_hidden_layers)
    trunk_out = (common_hidden_layers[-1] if common_hidden_layers
                 else observation_space_size)
    policy_params = make_mlp_params(
        k_p, [trunk_out] + policy_hidden_layers + [_POLICY_OUT])
    value_params = make_mlp_params(
        k_v, [trunk_out] + value_hidden_layers + [_VALUE_OUT])

    # f32 slabs for the strict numerical check; bf16 slabs for the
    # MXU-native path used in production on v6e/v7x.
    w32, b32, D, value_col = pack_agent_params(
        common_params, policy_params, value_params)
    wbf, bbf, _, _ = pack_agent_params(
        common_params, policy_params, value_params, weight_dtype=jnp.bfloat16)

    # --- tiny batch (single tile), f32 ---------------------------------------
    batch = 2
    x = jax.random.normal(k_x, (batch, observation_space_size), jnp.float32)
    parameters, state_value = agent_forward(x, w32, b32, value_col=value_col)
    jax.block_until_ready((parameters, state_value))

    ref_params, ref_value = reference_forward(
        x, common_params, policy_params, value_params)
    assert parameters.shape == (batch, _POLICY_OUT)
    assert state_value.shape == (batch, _VALUE_OUT)
    assert jnp.allclose(parameters, ref_params, atol=2e-5, rtol=2e-5)
    assert jnp.allclose(state_value, ref_value, atol=2e-5, rtol=2e-5)
    assert bool(jnp.all(parameters > 1.0))   # softplus(.) + 1 > 1

    # --- medium batch (two parallel tiles -> both v7x TCs busy), f32 ---------
    x_med = jax.random.normal(k_x2, (48, observation_space_size), jnp.float32)
    p_med, v_med = agent_forward(x_med, w32, b32, value_col=value_col)
    jax.block_until_ready((p_med, v_med))
    ref_pm, ref_vm = reference_forward(
        x_med, common_params, policy_params, value_params)
    assert jnp.allclose(p_med, ref_pm, atol=2e-5, rtol=2e-5)
    assert jnp.allclose(v_med, ref_vm, atol=2e-5, rtol=2e-5)

    # --- bf16 weight/activation path (v6e/v7x MXU-native), f32 accumulation --
    p_bf, v_bf = agent_forward(x_med, wbf, bbf, value_col=value_col,
                               compute_dtype=jnp.bfloat16)
    jax.block_until_ready((p_bf, v_bf))
    assert jnp.allclose(p_bf, ref_pm, atol=1e-1, rtol=1e-1)
    assert jnp.allclose(v_bf, ref_vm, atol=1e-1, rtol=1e-1)

    # Host-side glue mirroring _get_price (Beta mean as a deterministic action).
    # TODO(synk): Beta sampling / log_prob / entropy (train_act, act) are
    # torch.distributions host logic, intentionally not implemented in-kernel.
    diff = max_price - min_price
    mean_action = parameters[:, 0] / (parameters[:, 0] + parameters[:, 1])
    _price = mean_action * diff + min_price  # noqa: F841

    print("KERNEL_OK")
</pallas_src>

<mosaic_0001>
module attributes {stable_mosaic.version = 11 : i64} {
  func.func @kernel(%arg0: i32, %arg1: memref<8x128xf32, #tpu.memory_space<vmem>>, %arg2: memref<4x128x128xf32, #tpu.memory_space<vmem>>, %arg3: memref<4x1x128xf32, #tpu.memory_space<vmem>>, %arg4: memref<8x128xf32, #tpu.memory_space<vmem>>) attributes {dimension_semantics = [#tpu.dimension_semantics<parallel>], iteration_bounds = array<i64: 1>, scalar_prefetch = 0 : i64, scratch_operands = 0 : i64, tpu.core_type = #tpu.core_type<tc>, window_params = [{transform_indices = @transform_0, window_bounds = array<i64: 8, 128>}, {pipeline_mode = #tpu.pipeline_mode<synchronous>, transform_indices = @transform_1, window_bounds = array<i64: 4, 128, 128>}, {pipeline_mode = #tpu.pipeline_mode<synchronous>, transform_indices = @transform_2, window_bounds = array<i64: 4, 1, 128>}, {transform_indices = @transform_3, window_bounds = array<i64: 8, 128>}]} {
    %c0 = arith.constant 0 : index
    %c0_0 = arith.constant 0 : index
    %0 = vector.load %arg1[%c0, %c0_0] : memref<8x128xf32, #tpu.memory_space<vmem>>, vector<8x128xf32>
    %c0_1 = arith.constant 0 : index
    %c0_2 = arith.constant 0 : index
    %c0_3 = arith.constant 0 : index
    %1 = vector.load %arg2[%c0_1, %c0_2, %c0_3] : memref<4x128x128xf32, #tpu.memory_space<vmem>>, vector<1x128x128xf32>
    %2 = vector.shape_cast %1 : vector<1x128x128xf32> to vector<128x128xf32>
    %c0_4 = arith.constant 0 : index
    %c0_5 = arith.constant 0 : index
    %c0_6 = arith.constant 0 : index
    %3 = vector.load %arg3[%c0_4, %c0_5, %c0_6] : memref<4x1x128xf32, #tpu.memory_space<vmem>>, vector<1x1x128xf32>
    %4 = vector.shape_cast %3 : vector<1x1x128xf32> to vector<1x128xf32>
    %cst = arith.constant dense<0.000000e+00> : vector<8x128xf32>
    %5 = tpu.matmul %0, %2, %cst {dimension_numbers = #tpu.dot_dimension_numbers<[1], [0], [0], [1], [0, 0, 1, 1], [], []>} : vector<8x128xf32>, vector<128x128xf32>, vector<8x128xf32> -> vector<8x128xf32>
    %6 = vector.broadcast %4 : vector<1x128xf32> to vector<8x128xf32>
    %7 = arith.addf %5, %6 : vector<8x128xf32>
    %cst_7 = arith.constant 0.000000e+00 : f32
    %8 = vector.broadcast %cst_7 : f32 to vector<8x128xf32>
    %9 = arith.maximumf %7, %8 : vector<8x128xf32>
    %c1 = arith.constant 1 : index
    %c0_8 = arith.constant 0 : index
    %c0_9 = arith.constant 0 : index
    %10 = vector.load %arg2[%c1, %c0_8, %c0_9] : memref<4x128x128xf32, #tpu.memory_space<vmem>>, vector<1x128x128xf32>
    %11 = vector.shape_cast %10 : vector<1x128x128xf32> to vector<128x128xf32>
    %c1_10 = arith.constant 1 : index
    %c0_11 = arith.constant 0 : index
    %c0_12 = arith.constant 0 : index
    %12 = vector.load %arg3[%c1_10, %c0_11, %c0_12] : memref<4x1x128xf32, #tpu.memory_space<vmem>>, vector<1x1x128xf32>
    %13 = vector.shape_cast %12 : vector<1x1x128xf32> to vector<1x128xf32>
    %cst_13 = arith.constant dense<0.000000e+00> : vector<8x128xf32>
    %14 = tpu.matmul %9, %11, %cst_13 {dimension_numbers = #tpu.dot_dimension_numbers<[1], [0], [0], [1], [0, 0, 1, 1], [], []>} : vector<8x128xf32>, vector<128x128xf32>, vector<8x128xf32> -> vector<8x128xf32>
    %15 = vector.broadcast %13 : vector<1x128xf32> to vector<8x128xf32>
    %16 = arith.addf %14, %15 : vector<8x128xf32>
    %cst_14 = arith.constant 0.000000e+00 : f32
    %17 = vector.broadcast %cst_14 : f32 to vector<8x128xf32>
    %18 = arith.maximumf %16, %17 : vector<8x128xf32>
    %c2 = arith.constant 2 : index
    %c0_15 = arith.constant 0 : index
    %c0_16 = arith.constant 0 : index
    %19 = vector.load %arg2[%c2, %c0_15, %c0_16] : memref<4x128x128xf32, #tpu.memory_space<vmem>>, vector<1x128x128xf32>
    %20 = vector.shape_cast %19 : vector<1x128x128xf32> to vector<128x128xf32>
    %c2_17 = arith.constant 2 : index
    %c0_18 = arith.constant 0 : index
    %c0_19 = arith.constant 0 : index
    %21 = vector.load %arg3[%c2_17, %c0_18, %c0_19] : memref<4x1x128xf32, #tpu.memory_space<vmem>>, vector<1x1x128xf32>
    %22 = vector.shape_cast %21 : vector<1x1x128xf32> to vector<1x128xf32>
    %cst_20 = arith.constant dense<0.000000e+00> : vector<8x128xf32>
    %23 = tpu.matmul %18, %20, %cst_20 {dimension_numbers = #tpu.dot_dimension_numbers<[1], [0], [0], [1], [0, 0, 1, 1], [], []>} : vector<8x128xf32>, vector<128x128xf32>, vector<8x128xf32> -> vector<8x128xf32>
    %24 = vector.broadcast %22 : vector<1x128xf32> to vector<8x128xf32>
    %25 = arith.addf %23, %24 : vector<8x128xf32>
    %cst_21 = arith.constant 0.000000e+00 : f32
    %26 = vector.broadcast %cst_21 : f32 to vector<8x128xf32>
    %27 = arith.maximumf %25, %26 : vector<8x128xf32>
    %c3 = arith.constant 3 : index
    %c0_22 = arith.constant 0 : index
    %c0_23 = arith.constant 0 : index
    %28 = vector.load %arg2[%c3, %c0_22, %c0_23] : memref<4x128x128xf32, #tpu.memory_space<vmem>>, vector<1x128x128xf32>
    %29 = vector.shape_cast %28 : vector<1x128x128xf32> to vector<128x128xf32>
    %c3_24 = arith.constant 3 : index
    %c0_25 = arith.constant 0 : index
    %c0_26 = arith.constant 0 : index
    %30 = vector.load %arg3[%c3_24, %c0_25, %c0_26] : memref<4x1x128xf32, #tpu.memory_space<vmem>>, vector<1x1x128xf32>
    %31 = vector.shape_cast %30 : vector<1x1x128xf32> to vector<1x128xf32>
    %cst_27 = arith.constant dense<0.000000e+00> : vector<8x128xf32>
    %32 = tpu.matmul %27, %29, %cst_27 {dimension_numbers = #tpu.dot_dimension_numbers<[1], [0], [0], [1], [0, 0, 1, 1], [], []>} : vector<8x128xf32>, vector<128x128xf32>, vector<8x128xf32> -> vector<8x128xf32>
    %33 = vector.broadcast %31 : vector<1x128xf32> to vector<8x128xf32>
    %34 = arith.addf %32, %33 : vector<8x128xf32>
    %cst_28 = arith.constant 0.000000e+00 : f32
    %35 = vector.broadcast %cst_28 : f32 to vector<8x128xf32>
    %36 = arith.maximumf %34, %35 : vector<8x128xf32>
    %37 = math.absf %34 : vector<8x128xf32>
    %cst_29 = arith.constant 0.000000e+00 : f32
    %38 = vector.broadcast %cst_29 : f32 to vector<8x128xf32>
    %39 = arith.subf %38, %37 : vector<8x128xf32>
    %40 = math.exp %39 : vector<8x128xf32>
    %41 = math.log1p %40 : vector<8x128xf32>
    %42 = arith.addf %36, %41 : vector<8x128xf32>
    %43 = tpu.iota {dimensions = array<i32: 1>} : vector<8x128xi32>
    %c2_i32 = arith.constant 2 : i32
    %44 = vector.broadcast %c2_i32 : i32 to vector<8x128xi32>
    %45 = arith.cmpi slt, %43, %44 : vector<8x128xi32>
    %cst_30 = arith.constant 1.000000e+00 : f32
    %46 = vector.broadcast %cst_30 : f32 to vector<8x128xf32>
    %47 = arith.addf %42, %46 : vector<8x128xf32>
    %48 = arith.select %45, %47, %34 : vector<8x128xi1>, vector<8x128xf32>
    %c0_31 = arith.constant 0 : index
    %c0_32 = arith.constant 0 : index
    %49 = vector.load %arg4[%c0_31, %c0_32] : memref<8x128xf32, #tpu.memory_space<vmem>>, vector<8x128xf32>
    tpu.vector_store %arg4[%c0_31, %c0_32], %48 {strides = array<i32>} : memref<8x128xf32, #tpu.memory_space<vmem>>, vector<8x128xf32>,
    return
  }
  func.func @transform_0(%arg0: i32) -> (i32, i32) {
    %c0_i32 = arith.constant 0 : i32
    %c0_i32_0 = arith.constant 0 : i32
    return %arg0, %c0_i32 : i32, i32
  }
  func.func @transform_1(%arg0: i32) -> (i32, i32, i32) {
    %c0_i32 = arith.constant 0 : i32
    %c0_i32_0 = arith.constant 0 : i32
    %c0_i32_1 = arith.constant 0 : i32
    %c0_i32_2 = arith.constant 0 : i32
    return %c0_i32, %c0_i32_0, %c0_i32_1 : i32, i32, i32
  }
  func.func @transform_2(%arg0: i32) -> (i32, i32, i32) {
    %c0_i32 = arith.constant 0 : i32
    %c0_i32_0 = arith.constant 0 : i32
    %c0_i32_1 = arith.constant 0 : i32
    %c0_i32_2 = arith.constant 0 : i32
    return %c0_i32, %c0_i32_0, %c0_i32_1 : i32, i32, i32
  }
  func.func @transform_3(%arg0: i32) -> (i32, i32) {
    %c0_i32 = arith.constant 0 : i32
    %c0_i32_0 = arith.constant 0 : i32
    return %arg0, %c0_i32 : i32, i32
  }
}

</mosaic_0001>

<llo_original>
// kernel: agent_forward.1
$region0: #{agent_forward.1}
  #allocation0 [shape = 'u32[]', space=smem, size = 0x4, offset = 0x4, fixed_abs, tag = 'smem constant byte address 0x4 - core index']
  #allocation1 [shape = 'u32[144,128]{1,0:T(1,128)}', space=vmem, size = 0x12000, scoped, tag = 'internal scratch']
  %s0 = inlined_call_operand.vmem [shape: f32[8,128], index: 0, kind: input, shape index: {}]
  %s1 = inlined_call_operand.hbm [shape: f32[4,128,128], index: 1, kind: input, shape index: {}]
  %s2 = inlined_call_operand.vmem [shape: f32[4,1,128], index: 2, kind: input, shape index: {}]
  %s3 = inlined_call_operand.vmem [shape: f32[8,128], index: 3, kind: output, shape index: {}]
  %s4 = sld [smem:[#allocation0]]
  $region26: #{agent_forward.1} parent=0
    _
  %s6 = ssub.s32 1, %s4
  %s7 = scalar_select 0, %s6, %s4
  $region1: #{agent_forward.1} parent=0
    #allocation2 [shape = 'u8[262144]{0}', space=vmem, size = 0x40000, scoped, tag = 'input window, operand 1, single buffered']
    #allocation3 [shape = 's32[1]{0}', space=sflag, size = 0x4, scoped, tag = 'scoped memory for agent_forward.1']
    %8 = vsyncpa [#allocation3], 0
    // Predicated region
    $region2: #{agent_forward.1} parent=1 // pred_check
      _
    $region3: #{agent_forward.1} parent=1 // pred_check_branch
      %10 = sbr.rel (0) target = $region5
    $region4: #{agent_forward.1} parent=1 // pred_region
      _
    $region5: #{agent_forward.1} parent=1 // pred_fallthru
      _
    // Predicated region
    $region6: #{agent_forward.1} parent=1 // pred_check
      _
    $region7: #{agent_forward.1} parent=1 // pred_check_branch
      %12 = sbr.rel (0) target = $region9
    $region8: #{agent_forward.1} parent=1 // pred_region
      %s14 = ssub.s32 8192, 8192
      %15 = vsyncadd [#allocation3], %s14
      %s16 = sshll.u32 [#allocation2], 4
      %s17 = int_to_ptr.vmem [resolvable:$true] %s16
      %22 = dma.hbm_to_vmem [thread:$0]  %s1, 8192, %s17, [#allocation3], 128, 128, 8
    $region9: #{agent_forward.1} parent=1 // pred_fallthru
      _
    // Predicated region
    $region10: #{agent_forward.1} parent=1 // pred_check
      _
    $region11: #{agent_forward.1} parent=1 // pred_check_branch
      %24 = sbr.rel (0) target = $region13
    $region12: #{agent_forward.1} parent=1 // pred_region
      _
    $region13: #{agent_forward.1} parent=1 // pred_fallthru
      _
    // Predicated region
    $region14: #{agent_forward.1} parent=1 // pred_check
      _
    $region15: #{agent_forward.1} parent=1 // pred_check_branch
      %26 = sbr.rel (0) target = $region17
    $region16: #{agent_forward.1} parent=1 // pred_region
      %27 = dma.done [#allocation3], 8192
    $region17: #{agent_forward.1} parent=1 // pred_fallthru
      _
    %v28 = vld [vmem:[%s0] sm:$0xff]
    %v29 = vld [vmem:[#allocation2] sm:$0xff]
    %v30 = vld [vmem:[#allocation2 + $0x8] sm:$0xff]
    %v31 = vld [vmem:[#allocation2 + $0x10] sm:$0xff]
    %v32 = vld [vmem:[#allocation2 + $0x18] sm:$0xff]
    %v33 = vld [vmem:[#allocation2 + $0x20] sm:$0xff]
    %v34 = vld [vmem:[#allocation2 + $0x28] sm:$0xff]
    %v35 = vld [vmem:[#allocation2 + $0x30] sm:$0xff]
    %v36 = vld [vmem:[#allocation2 + $0x38] sm:$0xff]
    %v37 = vld [vmem:[#allocation2 + $0x40] sm:$0xff]
    %v38 = vld [vmem:[#allocation2 + $0x48] sm:$0xff]
    %v39 = vld [vmem:[#allocation2 + $0x50] sm:$0xff]
    %v40 = vld [vmem:[#allocation2 + $0x58] sm:$0xff]
    %v41 = vld [vmem:[#allocation2 + $0x60] sm:$0xff]
    %v42 = vld [vmem:[#allocation2 + $0x68] sm:$0xff]
    %v43 = vld [vmem:[#allocation2 + $0x70] sm:$0xff]
    %v44 = vld [vmem:[#allocation2 + $0x78] sm:$0xff]
    %v45 = vld [vmem:[%s2] sm:$0x1]
    %v47 = vlaneseq
    %v48 = vshrl.u32 %v47, 7
    %v49 = vsub.s32 0, %v48
    %v50 = vrot.slane %v45, %v49
    %52 = vmatprep.subr.mxu0 0.0
    %53 = vmatpush1.msra.mxu0 %v29
    %54 = vmatprep.subr.mxu0 0.0
    %55 = vmatpush1.msra.mxu0 %v30
    %56 = vmatprep.subr.mxu0 0.0
    %57 = vmatpush1.msra.mxu0 %v31
    %58 = vmatprep.subr.mxu0 0.0
    %59 = vmatpush1.msra.mxu0 %v32
    %60 = vmatprep.subr.mxu0 0.0
    %61 = vmatpush1.msra.mxu0 %v33
    %62 = vmatprep.subr.mxu0 0.0
    %63 = vmatpush1.msra.mxu0 %v34
    %64 = vmatprep.subr.mxu0 0.0
    %65 = vmatpush1.msra.mxu0 %v35
    %66 = vmatprep.subr.mxu0 0.0
    %67 = vmatpush1.msra.mxu0 %v36
    %68 = vmatprep.subr.mxu0 0.0
    %69 = vmatpush1.msra.mxu0 %v37
    %70 = vmatprep.subr.mxu0 0.0
    %71 = vmatpush1.msra.mxu0 %v38
    %72 = vmatprep.subr.mxu0 0.0
    %73 = vmatpush1.msra.mxu0 %v39
    %74 = vmatprep.subr.mxu0 0.0
    %75 = vmatpush1.msra.mxu0 %v40
    %76 = vmatprep.subr.mxu0 0.0
    %77 = vmatpush1.msra.mxu0 %v41
    %78 = vmatprep.subr.mxu0 0.0
    %79 = vmatpush1.msra.mxu0 %v42
    %80 = vmatprep.subr.mxu0 0.0
    %81 = vmatpush1.msra.mxu0 %v43
    %82 = vmatprep.subr.mxu0 0.0
    %83 = vmatpush1.msra.mxu0 %v44
    %84 = vmatprep.subr.mxu0 0.0
    %85 = vmatpush1.msra.mxu0 0.0
    %86 = vmatprep.subr.mxu0 0.0
    %87 = vmatpush1.msra.mxu0 0.0
    %88 = vmatprep.subr.mxu0 0.0
    %89 = vmatpush1.msra.mxu0 0.0
    %90 = vmatprep.subr.mxu0 0.0
    %91 = vmatpush1.msra.mxu0 0.0
    %92 = vmatprep.subr.mxu0 0.0
    %93 = vmatpush1.msra.mxu0 0.0
    %94 = vmatprep.subr.mxu0 0.0
    %95 = vmatpush1.msra.mxu0 0.0
    %96 = vmatprep.subr.mxu0 0.0
    %97 = vmatpush1.msra.mxu0 0.0
    %98 = vmatprep.subr.mxu0 0.0
    %99 = vmatpush1.msra.mxu0 0.0
    %100 = vmatprep.subr.mxu0 0.0
    %101 = vmatpush1.msra.mxu0 0.0
    %102 = vmatprep.subr.mxu0 0.0
    %103 = vmatpush1.msra.mxu0 0.0
    %104 = vmatprep.subr.mxu0 0.0
    %105 = vmatpush1.msra.mxu0 0.0
    %106 = vmatprep.subr.mxu0 0.0
    %107 = vmatpush1.msra.mxu0 0.0
    %108 = vmatprep.subr.mxu0 0.0
    %109 = vmatpush1.msra.mxu0 0.0
    %110 = vmatprep.subr.mxu0 0.0
    %111 = vmatpush1.msra.mxu0 0.0
    %112 = vmatprep.subr.mxu0 0.0
    %113 = vmatpush1.msra.mxu0 0.0
    %114 = vmatprep.subr.mxu0 0.0
    %115 = vmatpush1.msra.mxu0 0.0
    %116 = vmatprep.mubr.f32.mxu0 0.0
    %117 = vmatmul.mubr.f32.gmra.mrb[0].mxu0 %v28
    %v118 = vpop.f32.mrb[0].mxu0
    %v119 = vadd.f32 %v50, %v118
    %v120 = vpop.f32.mrb[0].mxu0
    %121 = vdwg.mxu0
    %v122 = vmax.f32 %v119, 0.0
    %s123 = scalar_lea.vmem [#allocation2], 128
    %v124 = vld [vmem:[%s123] sm:$0xff]
    %v125 = vld [vmem:[%s123 + $0x8] sm:$0xff]
    %v126 = vld [vmem:[%s123 + $0x10] sm:$0xff]
    %v127 = vld [vmem:[%s123 + $0x18] sm:$0xff]
    %v128 = vld [vmem:[%s123 + $0x20] sm:$0xff]
    %v129 = vld [vmem:[%s123 + $0x28] sm:$0xff]
    %v130 = vld [vmem:[%s123 + $0x30] sm:$0xff]
    %v131 = vld [vmem:[%s123 + $0x38] sm:$0xff]
    %v132 = vld [vmem:[%s123 + $0x40] sm:$0xff]
    %v133 = vld [vmem:[%s123 + $0x48] sm:$0xff]
    %v134 = vld [vmem:[%s123 + $0x50] sm:$0xff]
    %v135 = vld [vmem:[%s123 + $0x58] sm:$0xff]
    %v136 = vld [vmem:[%s123 + $0x60] sm:$0xff]
    %v137 = vld [vmem:[%s123 + $0x68] sm:$0xff]
    %v138 = vld [vmem:[%s123 + $0x70] sm:$0xff]
    %v139 = vld [vmem:[%s123 + $0x78] sm:$0xff]
    %s140 = scalar_lea.vmem %s2, 1
    %v141 = vld [vmem:[%s140] sm:$0x1]
    %v143 = vlaneseq
    %v144 = vshrl.u32 %v143, 7
    %v145 = vsub.s32 0, %v144
    %v146 = vrot.slane %v141, %v145
    %148 = vmatprep.subr.mxu0 0.0
    %149 = vmatpush1.msra.mxu0 %v124
    %150 = vmatprep.subr.mxu0 0.0
    %151 = vmatpush1.msra.mxu0 %v125
    %152 = vmatprep.subr.mxu0 0.0
    %153 = vmatpush1.msra.mxu0 %v126
    %154 = vmatprep.subr.mxu0 0.0
    %155 = vmatpush1.msra.mxu0 %v127
    %156 = vmatprep.subr.mxu0 0.0
    %157 = vmatpush1.msra.mxu0 %v128
    %158 = vmatprep.subr.mxu0 0.0
    %159 = vmatpush1.msra.mxu0 %v129
    %160 = vmatprep.subr.mxu0 0.0
    %161 = vmatpush1.msra.mxu0 %v130
    %162 = vmatprep.subr.mxu0 0.0
    %163 = vmatpush1.msra.mxu0 %v131
    %164 = vmatprep.subr.mxu0 0.0
    %165 = vmatpush1.msra.mxu0 %v132
    %166 = vmatprep.subr.mxu0 0.0
    %167 = vmatpush1.msra.mxu0 %v133
    %168 = vmatprep.subr.mxu0 0.0
    %169 = vmatpush1.msra.mxu0 %v134
    %170 = vmatprep.subr.mxu0 0.0
    %171 = vmatpush1.msra.mxu0 %v135
    %172 = vmatprep.subr.mxu0 0.0
    %173 = vmatpush1.msra.mxu0 %v136
    %174 = vmatprep.subr.mxu0 0.0
    %175 = vmatpush1.msra.mxu0 %v137
    %176 = vmatprep.subr.mxu0 0.0
    %177 = vmatpush1.msra.mxu0 %v138
    %178 = vmatprep.subr.mxu0 0.0
    %179 = vmatpush1.msra.mxu0 %v139
    %180 = vmatprep.subr.mxu0 0.0
    %181 = vmatpush1.msra.mxu0 0.0
    %182 = vmatprep.subr.mxu0 0.0
    %183 = vmatpush1.msra.mxu0 0.0
    %184 = vmatprep.subr.mxu0 0.0
    %185 = vmatpush1.msra.mxu0 0.0
    %186 = vmatprep.subr.mxu0 0.0
    %187 = vmatpush1.msra.mxu0 0.0
    %188 = vmatprep.subr.mxu0 0.0
    %189 = vmatpush1.msra.mxu0 0.0
    %190 = vmatprep.subr.mxu0 0.0
    %191 = vmatpush1.msra.mxu0 0.0
    %192 = vmatprep.subr.mxu0 0.0
    %193 = vmatpush1.msra.mxu0 0.0
    %194 = vmatprep.subr.mxu0 0.0
    %195 = vmatpush1.msra.mxu0 0.0
    %196 = vmatprep.subr.mxu0 0.0
    %197 = vmatpush1.msra.mxu0 0.0
    %198 = vmatprep.subr.mxu0 0.0
    %199 = vmatpush1.msra.mxu0 0.0
    %200 = vmatprep.subr.mxu0 0.0
    %201 = vmatpush1.msra.mxu0 0.0
    %202 = vmatprep.subr.mxu0 0.0
    %203 = vmatpush1.msra.mxu0 0.0
    %204 = vmatprep.subr.mxu0 0.0
    %205 = vmatpush1.msra.mxu0 0.0
    %206 = vmatprep.subr.mxu0 0.0
    %207 = vmatpush1.msra.mxu0 0.0
    %208 = vmatprep.subr.mxu0 0.0
    %209 = vmatpush1.msra.mxu0 0.0
    %210 = vmatprep.subr.mxu0 0.0
    %211 = vmatpush1.msra.mxu0 0.0
    %212 = vmatprep.mubr.f32.mxu0 0.0
    %213 = vmatmul.mubr.f32.gmra.mrb[0].mxu0 %v122
    %v214 = vpop.f32.mrb[0].mxu0
    %v215 = vadd.f32 %v146, %v214
    %v216 = vpop.f32.mrb[0].mxu0
    %217 = vdwg.mxu0
    %v218 = vmax.f32 %v215, 0.0
    %s219 = scalar_lea.vmem [#allocation2], 256
    %v220 = vld [vmem:[%s219] sm:$0xff]
    %v221 = vld [vmem:[%s219 + $0x8] sm:$0xff]
    %v222 = vld [vmem:[%s219 + $0x10] sm:$0xff]
    %v223 = vld [vmem:[%s219 + $0x18] sm:$0xff]
    %v224 = vld [vmem:[%s219 + $0x20] sm:$0xff]
    %v225 = vld [vmem:[%s219 + $0x28] sm:$0xff]
    %v226 = vld [vmem:[%s219 + $0x30] sm:$0xff]
    %v227 = vld [vmem:[%s219 + $0x38] sm:$0xff]
    %v228 = vld [vmem:[%s219 + $0x40] sm:$0xff]
    %v229 = vld [vmem:[%s219 + $0x48] sm:$0xff]
    %v230 = vld [vmem:[%s219 + $0x50] sm:$0xff]
    %v231 = vld [vmem:[%s219 + $0x58] sm:$0xff]
    %v232 = vld [vmem:[%s219 + $0x60] sm:$0xff]
    %v233 = vld [vmem:[%s219 + $0x68] sm:$0xff]
    %v234 = vld [vmem:[%s219 + $0x70] sm:$0xff]
    %v235 = vld [vmem:[%s219 + $0x78] sm:$0xff]
    %s236 = scalar_lea.vmem %s2, 2
    %v237 = vld [vmem:[%s236] sm:$0x1]
    %v239 = vlaneseq
    %v240 = vshrl.u32 %v239, 7
    %v241 = vsub.s32 0, %v240
    %v242 = vrot.slane %v237, %v241
    %244 = vmatprep.subr.mxu0 0.0
    %245 = vmatpush1.msra.mxu0 %v220
    %246 = vmatprep.subr.mxu0 0.0
    %247 = vmatpush1.msra.mxu0 %v221
    %248 = vmatprep.subr.mxu0 0.0
    %249 = vmatpush1.msra.mxu0 %v222
    %250 = vmatprep.subr.mxu0 0.0
    %251 = vmatpush1.msra.mxu0 %v223
    %252 = vmatprep.subr.mxu0 0.0
    %253 = vmatpush1.msra.mxu0 %v224
    %254 = vmatprep.subr.mxu0 0.0
    %255 = vmatpush1.msra.mxu0 %v225
    %256 = vmatprep.subr.mxu0 0.0
    %257 = vmatpush1.msra.mxu0 %v226
    %258 = vmatprep.subr.mxu0 0.0
    %259 = vmatpush1.msra.mxu0 %v227
    %260 = vmatprep.subr.mxu0 0.0
    %261 = vmatpush1.msra.mxu0 %v228
    %262 = vmatprep.subr.mxu0 0.0
    %263 = vmatpush1.msra.mxu0 %v229
    %264 = vmatprep.subr.mxu0 0.0
    %265 = vmatpush1.msra.mxu0 %v230
    %266 = vmatprep.subr.mxu0 0.0
    %267 = vmatpush1.msra.mxu0 %v231
    %268 = vmatprep.subr.mxu0 0.0
    %269 = vmatpush1.msra.mxu0 %v232
    %270 = vmatprep.subr.mxu0 0.0
    %271 = vmatpush1.msra.mxu0 %v233
    %272 = vmatprep.subr.mxu0 0.0
    %273 = vmatpush1.msra.mxu0 %v234
    %274 = vmatprep.subr.mxu0 0.0
    %275 = vmatpush1.msra.mxu0 %v235
    %276 = vmatprep.subr.mxu0 0.0
    %277 = vmatpush1.msra.mxu0 0.0
    %278 = vmatprep.subr.mxu0 0.0
    %279 = vmatpush1.msra.mxu0 0.0
    %280 = vmatprep.subr.mxu0 0.0
    %281 = vmatpush1.msra.mxu0 0.0
    %282 = vmatprep.subr.mxu0 0.0
    %283 = vmatpush1.msra.mxu0 0.0
    %284 = vmatprep.subr.mxu0 0.0
    %285 = vmatpush1.msra.mxu0 0.0
    %286 = vmatprep.subr.mxu0 0.0
    %287 = vmatpush1.msra.mxu0 0.0
    %288 = vmatprep.subr.mxu0 0.0
    %289 = vmatpush1.msra.mxu0 0.0
    %290 = vmatprep.subr.mxu0 0.0
    %291 = vmatpush1.msra.mxu0 0.0
    %292 = vmatprep.subr.mxu0 0.0
    %293 = vmatpush1.msra.mxu0 0.0
    %294 = vmatprep.subr.mxu0 0.0
    %295 = vmatpush1.msra.mxu0 0.0
    %296 = vmatprep.subr.mxu0 0.0
    %297 = vmatpush1.msra.mxu0 0.0
    %298 = vmatprep.subr.mxu0 0.0
    %299 = vmatpush1.msra.mxu0 0.0
    %300 = vmatprep.subr.mxu0 0.0
    %301 = vmatpush1.msra.mxu0 0.0
    %302 = vmatprep.subr.mxu0 0.0
    %303 = vmatpush1.msra.mxu0 0.0
    %304 = vmatprep.subr.mxu0 0.0
    %305 = vmatpush1.msra.mxu0 0.0
    %306 = vmatprep.subr.mxu0 0.0
    %307 = vmatpush1.msra.mxu0 0.0
    %308 = vmatprep.mubr.f32.mxu0 0.0
    %309 = vmatmul.mubr.f32.gmra.mrb[0].mxu0 %v218
    %v310 = vpop.f32.mrb[0].mxu0
    %v311 = vadd.f32 %v242, %v310
    %v312 = vpop.f32.mrb[0].mxu0
    %313 = vdwg.mxu0
    %v314 = vmax.f32 %v311, 0.0
    %s315 = scalar_lea.vmem [#allocation2], 384
    %v316 = vld [vmem:[%s315] sm:$0xff]
    %v317 = vld [vmem:[%s315 + $0x8] sm:$0xff]
    %v318 = vld [vmem:[%s315 + $0x10] sm:$0xff]
    %v319 = vld [vmem:[%s315 + $0x18] sm:$0xff]
    %v320 = vld [vmem:[%s315 + $0x20] sm:$0xff]
    %v321 = vld [vmem:[%s315 + $0x28] sm:$0xff]
    %v322 = vld [vmem:[%s315 + $0x30] sm:$0xff]
    %v323 = vld [vmem:[%s315 + $0x38] sm:$0xff]
    %v324 = vld [vmem:[%s315 + $0x40] sm:$0xff]
    %v325 = vld [vmem:[%s315 + $0x48] sm:$0xff]
    %v326 = vld [vmem:[%s315 + $0x50] sm:$0xff]
    %v327 = vld [vmem:[%s315 + $0x58] sm:$0xff]
    %v328 = vld [vmem:[%s315 + $0x60] sm:$0xff]
    %v329 = vld [vmem:[%s315 + $0x68] sm:$0xff]
    %v330 = vld [vmem:[%s315 + $0x70] sm:$0xff]
    %v331 = vld [vmem:[%s315 + $0x78] sm:$0xff]
    %s332 = scalar_lea.vmem %s2, 3
    %v333 = vld [vmem:[%s332] sm:$0x1]
    %v335 = vlaneseq
    %v336 = vshrl.u32 %v335, 7
    %v337 = vsub.s32 0, %v336
    %v338 = vrot.slane %v333, %v337
    %340 = vmatprep.subr.mxu0 0.0
    %341 = vmatpush1.msra.mxu0 %v316
    %342 = vmatprep.subr.mxu0 0.0
    %343 = vmatpush1.msra.mxu0 %v317
    %344 = vmatprep.subr.mxu0 0.0
    %345 = vmatpush1.msra.mxu0 %v318
    %346 = vmatprep.subr.mxu0 0.0
    %347 = vmatpush1.msra.mxu0 %v319
    %348 = vmatprep.subr.mxu0 0.0
    %349 = vmatpush1.msra.mxu0 %v320
    %350 = vmatprep.subr.mxu0 0.0
    %351 = vmatpush1.msra.mxu0 %v321
    %352 = vmatprep.subr.mxu0 0.0
    %353 = vmatpush1.msra.mxu0 %v322
    %354 = vmatprep.subr.mxu0 0.0
    %355 = vmatpush1.msra.mxu0 %v323
    %356 = vmatprep.subr.mxu0 0.0
    %357 = vmatpush1.msra.mxu0 %v324
    %358 = vmatprep.subr.mxu0 0.0
    %359 = vmatpush1.msra.mxu0 %v325
    %360 = vmatprep.subr.mxu0 0.0
    %361 = vmatpush1.msra.mxu0 %v326
    %362 = vmatprep.subr.mxu0 0.0
    %363 = vmatpush1.msra.mxu0 %v327
    %364 = vmatprep.subr.mxu0 0.0
    %365 = vmatpush1.msra.mxu0 %v328
    %366 = vmatprep.subr.mxu0 0.0
    %367 = vmatpush1.msra.mxu0 %v329
    %368 = vmatprep.subr.mxu0 0.0
    %369 = vmatpush1.msra.mxu0 %v330
    %370 = vmatprep.subr.mxu0 0.0
    %371 = vmatpush1.msra.mxu0 %v331
    %372 = vmatprep.subr.mxu0 0.0
    %373 = vmatpush1.msra.mxu0 0.0
    %374 = vmatprep.subr.mxu0 0.0
    %375 = vmatpush1.msra.mxu0 0.0
    %376 = vmatprep.subr.mxu0 0.0
    %377 = vmatpush1.msra.mxu0 0.0
    %378 = vmatprep.subr.mxu0 0.0
    %379 = vmatpush1.msra.mxu0 0.0
    %380 = vmatprep.subr.mxu0 0.0
    %381 = vmatpush1.msra.mxu0 0.0
    %382 = vmatprep.subr.mxu0 0.0
    %383 = vmatpush1.msra.mxu0 0.0
    %384 = vmatprep.subr.mxu0 0.0
    %385 = vmatpush1.msra.mxu0 0.0
    %386 = vmatprep.subr.mxu0 0.0
    %387 = vmatpush1.msra.mxu0 0.0
    %388 = vmatprep.subr.mxu0 0.0
    %389 = vmatpush1.msra.mxu0 0.0
    %390 = vmatprep.subr.mxu0 0.0
    %391 = vmatpush1.msra.mxu0 0.0
    %392 = vmatprep.subr.mxu0 0.0
    %393 = vmatpush1.msra.mxu0 0.0
    %394 = vmatprep.subr.mxu0 0.0
    %395 = vmatpush1.msra.mxu0 0.0
    %396 = vmatprep.subr.mxu0 0.0
    %397 = vmatpush1.msra.mxu0 0.0
    %398 = vmatprep.subr.mxu0 0.0
    %399 = vmatpush1.msra.mxu0 0.0
    %400 = vmatprep.subr.mxu0 0.0
    %401 = vmatpush1.msra.mxu0 0.0
    %402 = vmatprep.subr.mxu0 0.0
    %403 = vmatpush1.msra.mxu0 0.0
    %404 = vmatprep.mubr.f32.mxu0 0.0
    %405 = vmatmul.mubr.f32.gmra.mrb[0].mxu0 %v314
    %v406 = vpop.f32.mrb[0].mxu0
    %v407 = vadd.f32 %v338, %v406
    %v408 = vpop.f32.mrb[0].mxu0
    %409 = vdwg.mxu0
    %v410 = vmax.f32 %v407, 0.0
    %v411 = vand.u32 2147483647, %v407
    %v412 = vsub.f32 0.0, %v411
    %v413 = vmul.f32 %v412, 1.442695
    %v414 = vpow.pop %v413
    %v415 = vadd.f32 %v414, 1.0
    %v416 = vlog2.pop %v415
    %v417 = vmul.f32 %v416, 0.6931472
    %v418 = vmul.f32 -0.5, %v414
    %v419 = vadd.f32 %v418, 1.0
    %v420 = vmul.f32 %v419, %v414
    %v421 = vand.u32 2147483647, %v414
    %vm422 = vcmp.lt.f32.partialorder %v421, 0.0004427343
    %v423 = vsel %vm422, %v420, %v417
    %v424 = vadd.f32 %v410, %v423
    %v425 = vlaneseq
    %v426 = vand.u32 %v425, 127
    %vm427 = vcmp.lt.s32.totalorder %v426, 2
    %v428 = vadd.f32 %v424, 1.0
    %v429 = vsel %vm427, %v428, %v407
    %430 = vst [vmem:[%s3] sm:$0xff] %v429
    // Predicated region
    $region18: #{agent_forward.1} parent=1 // pred_check
      _
    $region19: #{agent_forward.1} parent=1 // pred_check_branch
      %432 = sbr.rel (0) target = $region21
    $region20: #{agent_forward.1} parent=1 // pred_region
      _
    $region21: #{agent_forward.1} parent=1 // pred_fallthru
      _
    // Predicated region
    $region22: #{agent_forward.1} parent=1 // pred_check
      _
    $region23: #{agent_forward.1} parent=1 // pred_check_branch
      %434 = sbr.rel (0) target = $region25
    $region24: #{agent_forward.1} parent=1 // pred_region
      _
    $region25: #{agent_forward.1} parent=1 // pred_fallthru
      _
    %435 = vsyncpa [#allocation3], 1

</llo_original>
